<compile_context>
chip_gen: v7x
topology: tpu7x:2x2x1
jax: 0.10.0
libtpu: 0.0.40
codegen_flags: <defaults>
</compile_context>

<pallas_src>
import functools

import jax
import jax.numpy as jnp
from jax.experimental import pallas as pl
from jax.experimental.pallas import tpu as pltpu

_EPS = 1e-6            # F.pairwise_distance default eps (added to the difference)
_LANES = 128
_VMEM_BUDGET = 16 * 1024 * 1024   # cap on the double-buffered working set


def _round_up(x, m):
    return (x + m - 1) // m * m


# ----------------------------------------------------------------------------
# Fast path: n % 128 == 0, everything lane-dense.
# ----------------------------------------------------------------------------
def _csa_loss_dense_kernel(x1_ref, x2_ref, ceq_ref, out_ref, *, margin):
    # x1_ref / x2_ref: (gb, 128, d)   ceq_ref / out_ref: (gb, 128)
    x1 = x1_ref[...].astype(jnp.float32)
    x2 = x2_ref[...].astype(jnp.float32)
    ceq = ceq_ref[...]                                    # already f32, lane-dense

    diff = x1 - x2 + _EPS                                 # torch: ||x1 - x2 + eps||
    sq = jnp.sum(diff * diff, axis=-1)                    # (gb, 128) lane-dense
    dist = jnp.sqrt(sq)
    hinge = jnp.maximum(jnp.float32(margin) - dist, 0.0)
    # class_eq * dist^2 + (1 - class_eq) * clamp(margin - dist, 0)^2
    # (dist^2 taken as the pre-sqrt sum of squares: differs from torch's
    #  sqrt-then-square by a few f32 ulps.)
    out_ref[...] = ceq * sq + (1.0 - ceq) * (hinge * hinge)


def _csa_loss_dense(x1, x2, ceq_f32, margin, target_block_bytes):
    n, d = x1.shape
    itemsize = jnp.dtype(x1.dtype).itemsize
    groups = n // _LANES
    d_pad = _round_up(d, _LANES)
    # One 128-row group of ONE input, as actually resident in VMEM (lane-padded).
    group_bytes = _LANES * d_pad * itemsize
    # 2 inputs x double-buffer, plus double-buffered (gb,128) f32 ceq & out blocks.
    per_group_vmem = 2 * 2 * group_bytes + 2 * 2 * _LANES * 4

    gb = min(max(1, target_block_bytes // group_bytes),   # ~target bytes of x1 per block
             max(1, _VMEM_BUDGET // per_group_vmem))      # stay inside the VMEM budget
    gb = max(8, gb // 8 * 8)
    if groups <= gb:
        gb = groups                                       # single block == full array dims
    else:
        # Prefer >= 4 grid steps so v7x can shard the "parallel" axis across
        # both TensorCores with reasonable balance.
        while gb > 8 and groups < 4 * gb:
            gb = max(8, (gb // 2) // 8 * 8)
    grid = (pl.cdiv(groups, gb),)

    # Free reshapes of contiguous arrays: only the leading dim is split.
    x1_3d = x1.reshape(groups, _LANES, d)
    x2_3d = x2.reshape(groups, _LANES, d)
    ceq_2d = ceq_f32.reshape(groups, _LANES)

    working = gb * per_group_vmem                          # padded, double-buffered
    vmem_limit = int(min(40 * 1024 * 1024, max(32 * 1024 * 1024, 2 * working)))

    kernel = functools.partial(_csa_loss_dense_kernel, margin=float(margin))
    per_row = pl.pallas_call(
        kernel,
        out_shape=jax.ShapeDtypeStruct((groups, _LANES), jnp.float32),
        grid_spec=pltpu.PrefetchScalarGridSpec(
            num_scalar_prefetch=0,
            grid=grid,
            in_specs=[
                pl.BlockSpec((gb, _LANES, d), lambda i: (i, 0, 0)),
                pl.BlockSpec((gb, _LANES, d), lambda i: (i, 0, 0)),
                pl.BlockSpec((gb, _LANES), lambda i: (i, 0)),
            ],
            out_specs=pl.BlockSpec((gb, _LANES), lambda i: (i, 0)),
        ),
        compiler_params=pltpu.CompilerParams(
            dimension_semantics=("parallel",),   # independent row tiles -> megacore on v7x
            vmem_limit_bytes=vmem_limit,
        ),
    )(x1_3d, x2_3d, ceq_2d)

    # All rows are real (n % 128 == 0); overhang groups of the last block are
    # clamped away by Pallas on write-back, so a plain sum is exact.
    return jnp.sum(per_row)


# ----------------------------------------------------------------------------
# Fallback path: arbitrary n, column ((tn, 1)) epilogue with masking.
# ----------------------------------------------------------------------------
def _csa_loss_column_kernel(x1_ref, x2_ref, ceq_ref, out_ref, *,
                            margin, total_n, block_rows, need_mask):
    x1 = x1_ref[...].astype(jnp.float32)
    x2 = x2_ref[...].astype(jnp.float32)
    ceq = ceq_ref[...]                                    # (tn, 1) f32

    diff = x1 - x2 + _EPS
    sq = jnp.sum(diff * diff, axis=-1, keepdims=True)     # (tn, 1)
    dist = jnp.sqrt(sq)
    hinge = jnp.maximum(jnp.float32(margin) - dist, 0.0)
    loss = ceq * sq + (1.0 - ceq) * (hinge * hinge)

    if need_mask:
        i = pl.program_id(0)
        rows = i * block_rows + jax.lax.broadcasted_iota(jnp.int32, loss.shape, 0)
        loss = jnp.where(rows < total_n, loss, 0.0)

    out_ref[...] = loss


def _csa_loss_column(x1, x2, ceq_f32, margin, target_block_bytes):
    n, d = x1.shape
    itemsize = jnp.dtype(x1.dtype).itemsize
    d_pad = _round_up(d, _LANES)
    row_bytes = d_pad * itemsize                          # lane-padded bytes of one row
    sub = max(8, 32 // itemsize)                          # sublane multiple: 8 f32 / 16 bf16 / 32 int8
    # Per-row VMEM: 2 double-buffered inputs + the (tn,1) ceq/out blocks, which
    # are lane-padded to 128 (this padding is what the old estimate missed).
    per_row_vmem = 2 * 2 * row_bytes + 2 * 2 * _LANES * 4

    tn = min(max(1, target_block_bytes // row_bytes),
             max(1, _VMEM_BUDGET // per_row_vmem))
    tn = max(sub, tn // sub * sub)
    if n <= tn:
        tn = n                                            # single block == full array dims
        need_mask = False
    else:
        need_mask = (n % tn) != 0
    grid = (pl.cdiv(n, tn),)
    n_pad = grid[0] * tn

    ceq_2d = ceq_f32.reshape(n, 1)

    working = tn * per_row_vmem
    vmem_limit = int(min(40 * 1024 * 1024, max(32 * 1024 * 1024, 2 * working)))

    kernel = functools.partial(_csa_loss_column_kernel, margin=float(margin),
                               total_n=n, block_rows=tn, need_mask=need_mask)
    per_row = pl.pallas_call(
        kernel,
        out_shape=jax.ShapeDtypeStruct((n_pad, 1), jnp.float32),
        grid_spec=pltpu.PrefetchScalarGridSpec(
            num_scalar_prefetch=0,
            grid=grid,
            in_specs=[
                pl.BlockSpec((tn, d), lambda i: (i, 0)),
                pl.BlockSpec((tn, d), lambda i: (i, 0)),
                pl.BlockSpec((tn, 1), lambda i: (i, 0)),
            ],
            out_specs=pl.BlockSpec((tn, 1), lambda i: (i, 0)),
        ),
        compiler_params=pltpu.CompilerParams(
            dimension_semantics=("parallel",),
            vmem_limit_bytes=vmem_limit,
        ),
    )(x1, x2, ceq_2d)

    # Padded rows are exactly 0 (masked), so the plain sum is exact.
    return jnp.sum(per_row)


# ----------------------------------------------------------------------------
# Public entry point.
# ----------------------------------------------------------------------------
def csa_loss(x1, x2, class_eq, margin=1.0, *, target_block_bytes=2 * 1024 * 1024):
    """Pallas TPU implementation of CSALoss.forward."""
    assert x1.ndim == 2 and x1.shape == x2.shape
    n, d = x1.shape
    # class_eq is tiny (n scalars): casting it to f32 in the wrapper costs
    # nothing and avoids bool/int refs in the kernel.  x1/x2 keep their native
    # dtype (bf16 callers keep half the HBM traffic).
    ceq_f32 = class_eq.reshape(n).astype(jnp.float32)

    itemsize = jnp.dtype(x1.dtype).itemsize
    group_bytes = _LANES * _round_up(d, _LANES) * itemsize
    dense_ok = (n % _LANES == 0) and (
        8 * (2 * 2 * group_bytes + 2 * 2 * _LANES * 4) <= _VMEM_BUDGET)

    if dense_ok:
        total = _csa_loss_dense(x1, x2, ceq_f32, margin, target_block_bytes)
    else:
        total = _csa_loss_column(x1, x2, ceq_f32, margin, target_block_bytes)
    return total / jnp.float32(n)


# ----------------------------------------------------------------------------
# Pure-JAX reference (mirrors the PyTorch module).
# ----------------------------------------------------------------------------
def _csa_loss_ref(x1, x2, class_eq, margin=1.0):
    diff = x1.astype(jnp.float32) - x2.astype(jnp.float32) + _EPS
    dist = jnp.sqrt(jnp.sum(diff * diff, axis=-1))
    ceq = class_eq.astype(jnp.float32)
    loss = ceq * dist**2 + (1.0 - ceq) * jnp.clip(margin - dist, 0.0, None) ** 2
    return jnp.mean(loss)


if __name__ == "__main__":
    key = jax.random.PRNGKey(0)

    # (N, D, dtype, target_block_bytes) — chosen to exercise:
    #   1) column fallback, single block (awkward small N)
    #   2) lane-dense path, single block, bf16 inputs
    #   3) lane-dense path, multi-block with leading-dim overhang
    #   4) column fallback, multi-block with remainder masking, odd D
    configs = [
        (16,   32, jnp.float32, 2 * 1024 * 1024),
        (256,  64, jnp.bfloat16, 2 * 1024 * 1024),
        (1280, 32, jnp.float32, 64 * 1024),
        (300,  20, jnp.float32, 16 * 1024),
    ]

    for N, D, dtype, tbb in configs:
        key, k1, k2, k3 = jax.random.split(key, 4)
        x1 = jax.random.normal(k1, (N, D), dtype=jnp.float32).astype(dtype)
        x2 = jax.random.normal(k2, (N, D), dtype=jnp.float32).astype(dtype)
        class_eq = jax.random.bernoulli(k3, 0.5, (N,)).astype(jnp.float32)

        out = csa_loss(x1, x2, class_eq, margin=1.0, target_block_bytes=tbb)
        out = jax.block_until_ready(out)
        ref = _csa_loss_ref(x1, x2, class_eq, margin=1.0)

        assert jnp.allclose(out, ref, rtol=1e-4, atol=1e-5), (N, D, dtype, out, ref)

    print("KERNEL_OK")
</pallas_src>

<mosaic_0001>
module attributes {stable_mosaic.version = 11 : i64} {
  func.func @_csa_loss_column_kernel(%arg0: i32, %arg1: memref<16x32xf32, #tpu.memory_space<vmem>>, %arg2: memref<16x32xf32, #tpu.memory_space<vmem>>, %arg3: memref<16x1xf32, #tpu.memory_space<vmem>>, %arg4: memref<16x1xf32, #tpu.memory_space<vmem>>) attributes {dimension_semantics = [#tpu.dimension_semantics<parallel>], iteration_bounds = array<i64: 1>, scalar_prefetch = 0 : i64, scratch_operands = 0 : i64, tpu.core_type = #tpu.core_type<tc>, window_params = [{transform_indices = @transform_0, window_bounds = array<i64: 16, 32>}, {transform_indices = @transform_1, window_bounds = array<i64: 16, 32>}, {transform_indices = @transform_2, window_bounds = array<i64: 16, 1>}, {transform_indices = @transform_3, window_bounds = array<i64: 16, 1>}]} {
    %c0 = arith.constant 0 : index
    %c0_0 = arith.constant 0 : index
    %0 = vector.load %arg1[%c0, %c0_0] : memref<16x32xf32, #tpu.memory_space<vmem>>, vector<16x32xf32>
    %c0_1 = arith.constant 0 : index
    %c0_2 = arith.constant 0 : index
    %1 = vector.load %arg2[%c0_1, %c0_2] : memref<16x32xf32, #tpu.memory_space<vmem>>, vector<16x32xf32>
    %c0_3 = arith.constant 0 : index
    %c0_4 = arith.constant 0 : index
    %2 = vector.load %arg3[%c0_3, %c0_4] : memref<16x1xf32, #tpu.memory_space<vmem>>, vector<16x1xf32>
    %3 = arith.subf %0, %1 : vector<16x32xf32>
    %cst = arith.constant 9.99999997E-7 : f32
    %4 = vector.broadcast %cst : f32 to vector<16x32xf32>
    %5 = arith.addf %3, %4 : vector<16x32xf32>
    %6 = arith.mulf %5, %5 : vector<16x32xf32>
    %cst_5 = arith.constant dense<0.000000e+00> : vector<16xf32>
    %7 = vector.multi_reduction <add>, %6, %cst_5 [1] : vector<16x32xf32> to vector<16xf32>
    %8 = vector.shape_cast %7 : vector<16xf32> to vector<16x1xf32>
    %9 = math.sqrt %8 : vector<16x1xf32>
    %cst_6 = arith.constant 1.000000e+00 : f32
    %10 = vector.broadcast %cst_6 : f32 to vector<16x1xf32>
    %11 = arith.subf %10, %9 : vector<16x1xf32>
    %cst_7 = arith.constant 0.000000e+00 : f32
    %12 = vector.broadcast %cst_7 : f32 to vector<16x1xf32>
    %13 = arith.maximumf %11, %12 : vector<16x1xf32>
    %14 = arith.mulf %2, %8 : vector<16x1xf32>
    %cst_8 = arith.constant 1.000000e+00 : f32
    %15 = vector.broadcast %cst_8 : f32 to vector<16x1xf32>
    %16 = arith.subf %15, %2 : vector<16x1xf32>
    %17 = arith.mulf %13, %13 : vector<16x1xf32>
    %18 = arith.mulf %16, %17 : vector<16x1xf32>
    %19 = arith.addf %14, %18 : vector<16x1xf32>
    %c0_9 = arith.constant 0 : index
    %c0_10 = arith.constant 0 : index
    %20 = vector.load %arg4[%c0_9, %c0_10] : memref<16x1xf32, #tpu.memory_space<vmem>>, vector<16x1xf32>
    tpu.vector_store %arg4[%c0_9, %c0_10], %19 {strides = array<i32>} : memref<16x1xf32, #tpu.memory_space<vmem>>, vector<16x1xf32>,
    return
  }
  func.func @transform_0(%arg0: i32) -> (i32, i32) {
    %c0_i32 = arith.constant 0 : i32
    %c0_i32_0 = arith.constant 0 : i32
    return %arg0, %c0_i32 : i32, i32
  }
  func.func @transform_1(%arg0: i32) -> (i32, i32) {
    %c0_i32 = arith.constant 0 : i32
    %c0_i32_0 = arith.constant 0 : i32
    return %arg0, %c0_i32 : i32, i32
  }
  func.func @transform_2(%arg0: i32) -> (i32, i32) {
    %c0_i32 = arith.constant 0 : i32
    %c0_i32_0 = arith.constant 0 : i32
    return %arg0, %c0_i32 : i32, i32
  }
  func.func @transform_3(%arg0: i32) -> (i32, i32) {
    %c0_i32 = arith.constant 0 : i32
    %c0_i32_0 = arith.constant 0 : i32
    return %arg0, %c0_i32 : i32, i32
  }
}

</mosaic_0001>

<llo_original>
// kernel: tpu_custom_call.1
$region0: #{tpu_custom_call.1}
  #allocation0 [shape = 'u32[]', space=smem, size = 0x4, offset = 0x4, fixed_abs, tag = 'smem constant byte address 0x4 - core index']
  #allocation1 [shape = 'u32[144,128]{1,0:T(1,128)}', space=vmem, size = 0x12000, scoped, tag = 'internal scratch']
  %s0 = inlined_call_operand.vmem [shape: f32[16,32], index: 0, kind: input, shape index: {}]
  %s1 = inlined_call_operand.hbm [shape: f32[16,32], index: 1, kind: input, shape index: {}]
  %s2 = inlined_call_operand.vmem [shape: f32[16,1], index: 2, kind: input, shape index: {}]
  %s3 = inlined_call_operand.vmem [shape: f32[16,1], index: 3, kind: output, shape index: {}]
  %s4 = sld [smem:[#allocation0]]
  $region26: #{tpu_custom_call.1} parent=0
    _
  %s6 = ssub.s32 1, %s4
  %s7 = scalar_select 0, %s6, %s4
  $region1: #{tpu_custom_call.1} parent=0
    #allocation2 [shape = 'u8[8192]{0}', space=vmem, size = 0x2000, scoped, tag = 'input window, operand 1, single buffered']
    #allocation3 [shape = 's32[1]{0}', space=sflag, size = 0x4, scoped, tag = 'scoped memory for tpu_custom_call.1']
    %8 = vsyncpa [#allocation3], 0
    // Predicated region
    $region2: #{tpu_custom_call.1} parent=1 // pred_check
      _
    $region3: #{tpu_custom_call.1} parent=1 // pred_check_branch
      %10 = sbr.rel (0) target = $region5
    $region4: #{tpu_custom_call.1} parent=1 // pred_region
      _
    $region5: #{tpu_custom_call.1} parent=1 // pred_fallthru
      _
    // Predicated region
    $region6: #{tpu_custom_call.1} parent=1 // pred_check
      _
    $region7: #{tpu_custom_call.1} parent=1 // pred_check_branch
      %12 = sbr.rel (0) target = $region9
    $region8: #{tpu_custom_call.1} parent=1 // pred_region
      %s14 = ssub.s32 256, 256
      %15 = vsyncadd [#allocation3], %s14
      %s16 = sshll.u32 [#allocation2], 4
      %s17 = int_to_ptr.vmem [resolvable:$true] %s16
      %22 = dma.hbm_to_vmem [thread:$0]  %s1, 256, %s17, [#allocation3], 128, 128, 8
    $region9: #{tpu_custom_call.1} parent=1 // pred_fallthru
      _
    // Predicated region
    $region10: #{tpu_custom_call.1} parent=1 // pred_check
      _
    $region11: #{tpu_custom_call.1} parent=1 // pred_check_branch
      %24 = sbr.rel (0) target = $region13
    $region12: #{tpu_custom_call.1} parent=1 // pred_region
      _
    $region13: #{tpu_custom_call.1} parent=1 // pred_fallthru
      _
    // Predicated region
    $region14: #{tpu_custom_call.1} parent=1 // pred_check
      _
    $region15: #{tpu_custom_call.1} parent=1 // pred_check_branch
      %26 = sbr.rel (0) target = $region17
    $region16: #{tpu_custom_call.1} parent=1 // pred_region
      %27 = dma.done [#allocation3], 256
    $region17: #{tpu_custom_call.1} parent=1 // pred_fallthru
      _
    %v28 = vld [vmem:[%s0] sm:$0xff]
    %v29 = vld [vmem:[%s0 + $0x8] sm:$0xff]
    %v30 = vld [vmem:[#allocation2] sm:$0xff]
    %v31 = vld [vmem:[#allocation2 + $0x8] sm:$0xff]
    %v32 = vld [vmem:[%s2] sm:$0xff]
    %v33 = vld [vmem:[%s2 + $0x8] sm:$0xff]
    %v34 = vsub.f32 %v28, %v30
    %v35 = vsub.f32 %v29, %v31
    %v36 = vadd.f32 %v34, 1e-06
    %v37 = vadd.f32 %v35, 1e-06
    %v38 = vmul.f32 %v36, %v36
    %v39 = vmul.f32 %v37, %v37
    %vm40 = vcmask 261120
    %v41 = vsel %vm40, %v38, 0.0
    %42 = vadd.xlane.f32.xlu0 %v41
    %v43 = vpop.xlane.xlu0 %42
    %v44 = vsel %vm40, %v39, 0.0
    %45 = vadd.xlane.f32.xlu0 %v44
    %v46 = vpop.xlane.xlu0 %45
    %v47 = vrsqrt.pop %v43
    %v48 = vmul.f32 %v43, %v47
    %vm49 = vcmp.eq.f32.partialorder %v43, inf
    %v50 = vsel %vm49, %v43, %v48
    %vm51 = vcmp.eq.f32.partialorder %v43, 0.0
    %v52 = vand.u32 %v43, 2147483648
    %v53 = vsel %vm51, %v52, %v50
    %v54 = vrsqrt.pop %v46
    %v55 = vmul.f32 %v46, %v54
    %vm56 = vcmp.eq.f32.partialorder %v46, inf
    %v57 = vsel %vm56, %v46, %v55
    %vm58 = vcmp.eq.f32.partialorder %v46, 0.0
    %v59 = vand.u32 %v46, 2147483648
    %v60 = vsel %vm58, %v59, %v57
    %v61 = vsub.f32 1.0, %v53
    %v62 = vsub.f32 1.0, %v60
    %v63 = vmax.f32 %v61, 0.0
    %v64 = vmax.f32 %v62, 0.0
    %v65 = vmul.f32 %v32, %v43
    %v66 = vmul.f32 %v33, %v46
    %v67 = vsub.f32 1.0, %v32
    %v68 = vsub.f32 1.0, %v33
    %v69 = vmul.f32 %v63, %v63
    %v70 = vmul.f32 %v64, %v64
    %v71 = vmul.f32 %v67, %v69
    %v72 = vmul.f32 %v68, %v70
    %v73 = vadd.f32 %v65, %v71
    %v74 = vadd.f32 %v66, %v72
    %vm75 = vcmask 7168
    %76 = vst.msk [vmem:[%s3] sm:$0xff] %vm75, %v73
    %77 = vst.msk [vmem:[%s3 + $0x8] sm:$0xff] %vm75, %v74
    // Predicated region
    $region18: #{tpu_custom_call.1} parent=1 // pred_check
      _
    $region19: #{tpu_custom_call.1} parent=1 // pred_check_branch
      %79 = sbr.rel (0) target = $region21
    $region20: #{tpu_custom_call.1} parent=1 // pred_region
      _
    $region21: #{tpu_custom_call.1} parent=1 // pred_fallthru
      _
    // Predicated region
    $region22: #{tpu_custom_call.1} parent=1 // pred_check
      _
    $region23: #{tpu_custom_call.1} parent=1 // pred_check_branch
      %81 = sbr.rel (0) target = $region25
    $region24: #{tpu_custom_call.1} parent=1 // pred_region
      _
    $region25: #{tpu_custom_call.1} parent=1 // pred_fallthru
      _
    %82 = vsyncpa [#allocation3], 1

</llo_original>
